<compile_context>
chip_gen: v5e
topology: v5e:2x2
jax: 0.10.0
libtpu: 0.0.40
codegen_flags: <defaults>
</compile_context>

<pallas_src>
import math

import jax
import jax.numpy as jnp
from jax.experimental import pallas as pl
from jax.experimental.pallas import tpu as pltpu


def _round_up(n, m):
    return ((n + m - 1) // m) * m


def _mlp_kernel(x_ref, w1_ref, b1_ref, w2_ref, b2_ref, o_ref):
    # First Linear: bf16 MXU operands, f32 accumulate.
    h = jnp.dot(x_ref[...], w1_ref[...], preferred_element_type=jnp.float32)
    h = h + b1_ref[...]                       # (tm, hidden_p) + (1, hidden_p)

    # Exact GELU in f32 (matches torch.nn.GELU() default, erf-based).
    h = 0.5 * h * (1.0 + jax.lax.erf(h * (1.0 / math.sqrt(2.0))))

    # Second Linear: cast activation back to the MXU operand dtype.
    o = jnp.dot(h.astype(w2_ref.dtype), w2_ref[...],
                preferred_element_type=jnp.float32)
    o = o + b2_ref[...]                       # (tm, dim_p) + (1, dim_p)
    o_ref[...] = o.astype(o_ref.dtype)


def mlp_pallas(x, w1, b1, w2, b2, *, tm=256, compute_dtype=jnp.bfloat16):
    """x: (batch, seq, dim) float32.  Returns (batch, seq, dim) float32."""
    batch, seq, dim = x.shape
    hidden = w1.shape[1]
    rows = batch * seq

    # ---- lane-dense / MXU-friendly padding of feature dims to 128 multiples.
    dim_p = _round_up(dim, 128)
    hidden_p = _round_up(hidden, 128)

    # ---- row tile: MXU-sized, but clamped for tiny inputs; multiple of 8.
    tm = max(8, min(tm, _round_up(rows, 8)))
    rows_p = _round_up(rows, tm)              # ragged last tile -> zero-pad rows

    x2d = jnp.pad(x.reshape(rows, dim),
                  ((0, rows_p - rows), (0, dim_p - dim)))
    w1_p = jnp.pad(w1, ((0, dim_p - dim), (0, hidden_p - hidden)))
    w2_p = jnp.pad(w2, ((0, hidden_p - hidden), (0, dim_p - dim)))
    b1_p = jnp.pad(b1, (0, hidden_p - hidden)).reshape(1, hidden_p)
    b2_p = jnp.pad(b2, (0, dim_p - dim)).reshape(1, dim_p)

    # bf16 operands for the MXU; biases / accumulation stay f32.
    x2d = x2d.astype(compute_dtype)
    w1_p = w1_p.astype(compute_dtype)
    w2_p = w2_p.astype(compute_dtype)

    grid = (rows_p // tm,)

    # ---- explicit VMEM budget: double-buffered streamed tiles + resident
    # weights/biases + the (tm, hidden_p) f32 intermediate, with headroom.
    cd_bytes = jnp.dtype(compute_dtype).itemsize
    needed = (
        2 * tm * dim_p * cd_bytes            # x tile (double-buffered)
        + 2 * tm * dim_p * 4                 # out tile (f32, double-buffered)
        + 2 * dim_p * hidden_p * cd_bytes    # W1 (resident)
        + 2 * hidden_p * dim_p * cd_bytes    # W2 (resident)
        + 2 * (hidden_p + dim_p) * 4         # biases
        + tm * hidden_p * 4                  # GELU intermediate h (f32)
        + tm * dim_p * 4                     # second-matmul accumulator (f32)
    )
    vmem_limit = int(min(max(2 * needed, 32 * 2 ** 20), 96 * 2 ** 20))
    # TODO(synk): for v7x (64 MiB VMEM) with very large hidden dims, add a
    # second "arbitrary" grid axis over hidden chunks instead of keeping the
    # full W1/W2 resident.

    out2d = pl.pallas_call(
        _mlp_kernel,
        out_shape=jax.ShapeDtypeStruct((rows_p, dim_p), jnp.float32),
        grid_spec=pltpu.PrefetchScalarGridSpec(
            num_scalar_prefetch=0,
            grid=grid,
            in_specs=[
                pl.BlockSpec((tm, dim_p), lambda i: (i, 0)),       # x tile (streamed)
                pl.BlockSpec((dim_p, hidden_p), lambda i: (0, 0)),  # W1 (resident)
                pl.BlockSpec((1, hidden_p), lambda i: (0, 0)),      # b1
                pl.BlockSpec((hidden_p, dim_p), lambda i: (0, 0)),  # W2 (resident)
                pl.BlockSpec((1, dim_p), lambda i: (0, 0)),         # b2
            ],
            out_specs=pl.BlockSpec((tm, dim_p), lambda i: (i, 0)),  # lane-dense out
        ),
        compiler_params=pltpu.CompilerParams(
            dimension_semantics=("parallel",),
            vmem_limit_bytes=vmem_limit,
        ),
    )(x2d, w1_p, b1_p, w2_p, b2_p)

    # Strip row / feature padding.
    return out2d[:rows, :dim].reshape(batch, seq, dim).astype(x.dtype)


def _reference_mlp(x, w1, b1, w2, b2):
    h = x @ w1 + b1
    h = 0.5 * h * (1.0 + jax.lax.erf(h / jnp.sqrt(2.0)))
    return h @ w2 + b2


if __name__ == "__main__":
    # Small shapes consistent with the module's forward:
    #   x.shape = (batch_size, n_patches + 1, dim)
    batch = 2
    n_patches_plus_1 = 8   # n_patches = 7
    dim = 32
    hidden_dim = 64

    key = jax.random.PRNGKey(0)
    kx, kw1, kb1, kw2, kb2 = jax.random.split(key, 5)

    x = jax.random.normal(kx, (batch, n_patches_plus_1, dim), dtype=jnp.float32)

    # Deterministic parameter init (uniform, like torch Linear default scale).
    lim1 = 1.0 / math.sqrt(dim)
    lim2 = 1.0 / math.sqrt(hidden_dim)
    w1 = jax.random.uniform(kw1, (dim, hidden_dim), jnp.float32, -lim1, lim1)
    b1 = jax.random.uniform(kb1, (hidden_dim,), jnp.float32, -lim1, lim1)
    w2 = jax.random.uniform(kw2, (hidden_dim, dim), jnp.float32, -lim2, lim2)
    b2 = jax.random.uniform(kb2, (dim,), jnp.float32, -lim2, lim2)

    out = mlp_pallas(x, w1, b1, w2, b2, tm=256)
    out = jax.block_until_ready(out)

    ref = _reference_mlp(x, w1, b1, w2, b2)
    assert out.shape == (batch, n_patches_plus_1, dim)
    # bf16 MXU operands with f32 accumulation -> ~1e-3..1e-2 abs error vs f32 ref.
    assert jnp.allclose(out, ref, atol=2e-2, rtol=2e-2), "mismatch vs reference"

    print("KERNEL_OK")
</pallas_src>

<mosaic_0001>
module attributes {stable_mosaic.version = 11 : i64} {
  func.func @_mlp_kernel(%arg0: i32, %arg1: memref<16x128xbf16, #tpu.memory_space<vmem>>, %arg2: memref<128x128xbf16, #tpu.memory_space<vmem>>, %arg3: memref<1x128xf32, #tpu.memory_space<vmem>>, %arg4: memref<128x128xbf16, #tpu.memory_space<vmem>>, %arg5: memref<1x128xf32, #tpu.memory_space<vmem>>, %arg6: memref<16x128xf32, #tpu.memory_space<vmem>>) attributes {dimension_semantics = [#tpu.dimension_semantics<parallel>], iteration_bounds = array<i64: 1>, scalar_prefetch = 0 : i64, scratch_operands = 0 : i64, tpu.core_type = #tpu.core_type<tc>, window_params = [{transform_indices = @transform_0, window_bounds = array<i64: 16, 128>}, {pipeline_mode = #tpu.pipeline_mode<synchronous>, transform_indices = @transform_1, window_bounds = array<i64: 128, 128>}, {pipeline_mode = #tpu.pipeline_mode<synchronous>, transform_indices = @transform_2, window_bounds = array<i64: 1, 128>}, {pipeline_mode = #tpu.pipeline_mode<synchronous>, transform_indices = @transform_3, window_bounds = array<i64: 128, 128>}, {pipeline_mode = #tpu.pipeline_mode<synchronous>, transform_indices = @transform_4, window_bounds = array<i64: 1, 128>}, {transform_indices = @transform_5, window_bounds = array<i64: 16, 128>}]} {
    %c0 = arith.constant 0 : index
    %c0_0 = arith.constant 0 : index
    %0 = vector.load %arg1[%c0, %c0_0] : memref<16x128xbf16, #tpu.memory_space<vmem>>, vector<16x128xbf16>
    %c0_1 = arith.constant 0 : index
    %c0_2 = arith.constant 0 : index
    %1 = vector.load %arg2[%c0_1, %c0_2] : memref<128x128xbf16, #tpu.memory_space<vmem>>, vector<128x128xbf16>
    %cst = arith.constant dense<0.000000e+00> : vector<16x128xf32>
    %2 = tpu.matmul %0, %1, %cst {dimension_numbers = #tpu.dot_dimension_numbers<[1], [0], [0], [1], [0, 0, 1, 1], [], []>} : vector<16x128xbf16>, vector<128x128xbf16>, vector<16x128xf32> -> vector<16x128xf32>
    %c0_3 = arith.constant 0 : index
    %c0_4 = arith.constant 0 : index
    %3 = vector.load %arg3[%c0_3, %c0_4] : memref<1x128xf32, #tpu.memory_space<vmem>>, vector<1x128xf32>
    %4 = vector.broadcast %3 : vector<1x128xf32> to vector<16x128xf32>
    %5 = arith.addf %2, %4 : vector<16x128xf32>
    %cst_5 = arith.constant 5.000000e-01 : f32
    %6 = vector.broadcast %cst_5 : f32 to vector<16x128xf32>
    %7 = arith.mulf %6, %5 : vector<16x128xf32>
    %cst_6 = arith.constant 0.707106769 : f32
    %8 = vector.broadcast %cst_6 : f32 to vector<16x128xf32>
    %9 = arith.mulf %5, %8 : vector<16x128xf32>
    %10 = math.erf %9 : vector<16x128xf32>
    %cst_7 = arith.constant 1.000000e+00 : f32
    %11 = vector.broadcast %cst_7 : f32 to vector<16x128xf32>
    %12 = arith.addf %11, %10 : vector<16x128xf32>
    %13 = arith.mulf %7, %12 : vector<16x128xf32>
    %14 = arith.truncf %13 : vector<16x128xf32> to vector<16x128xbf16>
    %c0_8 = arith.constant 0 : index
    %c0_9 = arith.constant 0 : index
    %15 = vector.load %arg4[%c0_8, %c0_9] : memref<128x128xbf16, #tpu.memory_space<vmem>>, vector<128x128xbf16>
    %cst_10 = arith.constant dense<0.000000e+00> : vector<16x128xf32>
    %16 = tpu.matmul %14, %15, %cst_10 {dimension_numbers = #tpu.dot_dimension_numbers<[1], [0], [0], [1], [0, 0, 1, 1], [], []>} : vector<16x128xbf16>, vector<128x128xbf16>, vector<16x128xf32> -> vector<16x128xf32>
    %c0_11 = arith.constant 0 : index
    %c0_12 = arith.constant 0 : index
    %17 = vector.load %arg5[%c0_11, %c0_12] : memref<1x128xf32, #tpu.memory_space<vmem>>, vector<1x128xf32>
    %18 = vector.broadcast %17 : vector<1x128xf32> to vector<16x128xf32>
    %19 = arith.addf %16, %18 : vector<16x128xf32>
    %c0_13 = arith.constant 0 : index
    %c0_14 = arith.constant 0 : index
    %20 = vector.load %arg6[%c0_13, %c0_14] : memref<16x128xf32, #tpu.memory_space<vmem>>, vector<16x128xf32>
    tpu.vector_store %arg6[%c0_13, %c0_14], %19 {strides = array<i32>} : memref<16x128xf32, #tpu.memory_space<vmem>>, vector<16x128xf32>,
    return
  }
  func.func @transform_0(%arg0: i32) -> (i32, i32) {
    %c0_i32 = arith.constant 0 : i32
    %c0_i32_0 = arith.constant 0 : i32
    return %arg0, %c0_i32 : i32, i32
  }
  func.func @transform_1(%arg0: i32) -> (i32, i32) {
    %c0_i32 = arith.constant 0 : i32
    %c0_i32_0 = arith.constant 0 : i32
    %c0_i32_1 = arith.constant 0 : i32
    return %c0_i32, %c0_i32_0 : i32, i32
  }
  func.func @transform_2(%arg0: i32) -> (i32, i32) {
    %c0_i32 = arith.constant 0 : i32
    %c0_i32_0 = arith.constant 0 : i32
    %c0_i32_1 = arith.constant 0 : i32
    return %c0_i32, %c0_i32_0 : i32, i32
  }
  func.func @transform_3(%arg0: i32) -> (i32, i32) {
    %c0_i32 = arith.constant 0 : i32
    %c0_i32_0 = arith.constant 0 : i32
    %c0_i32_1 = arith.constant 0 : i32
    return %c0_i32, %c0_i32_0 : i32, i32
  }
  func.func @transform_4(%arg0: i32) -> (i32, i32) {
    %c0_i32 = arith.constant 0 : i32
    %c0_i32_0 = arith.constant 0 : i32
    %c0_i32_1 = arith.constant 0 : i32
    return %c0_i32, %c0_i32_0 : i32, i32
  }
  func.func @transform_5(%arg0: i32) -> (i32, i32) {
    %c0_i32 = arith.constant 0 : i32
    %c0_i32_0 = arith.constant 0 : i32
    return %arg0, %c0_i32 : i32, i32
  }
}

</mosaic_0001>

<llo_original>
// kernel: tpu_custom_call.1
$region0: #{tpu_custom_call.1}
  #allocation0 [shape = 'u32[]', space=smem, size = 0x4, offset = 0x4, fixed_abs, tag = 'smem constant byte address 0x4 - core index']
  #allocation1 [shape = 'u32[72,128]{1,0:T(1,128)}', space=vmem, size = 0x9000, scoped, tag = 'internal scratch']
  %s0 = inlined_call_operand.hbm [shape: bf16[16,128], index: 0, kind: input, shape index: {}]
  %s1 = inlined_call_operand.hbm [shape: bf16[128,128], index: 1, kind: input, shape index: {}]
  %s2 = inlined_call_operand.vmem [shape: f32[1,128], index: 2, kind: input, shape index: {}]
  %s3 = inlined_call_operand.hbm [shape: bf16[128,128], index: 3, kind: input, shape index: {}]
  %s4 = inlined_call_operand.vmem [shape: f32[1,128], index: 4, kind: input, shape index: {}]
  %s5 = inlined_call_operand.hbm [shape: f32[16,128], index: 5, kind: output, shape index: {}]
  %s6 = sld [smem:[#allocation0]]
  $region42: #{tpu_custom_call.1} parent=0
    _
  %s8 = ssub.s32 1, %s6
  %s9 = scalar_select 0, %s8, %s6
  $region1: #{tpu_custom_call.1} parent=0
    #allocation2 [shape = 'u8[4096]{0}', space=vmem, size = 0x1000, scoped, tag = 'input window, operand 0, single buffered']
    #allocation3 [shape = 's32[1]{0}', space=sflag, size = 0x4, scoped, tag = 'scoped memory for tpu_custom_call.1']
    #allocation4 [shape = 's32[1]{0}', space=sflag, size = 0x4, scoped, tag = 'scoped memory for tpu_custom_call.1']
    #allocation5 [shape = 'u8[32768]{0}', space=vmem, size = 0x8000, scoped, tag = 'input window, operand 1, single buffered']
    #allocation6 [shape = 's32[1]{0}', space=sflag, size = 0x4, scoped, tag = 'scoped memory for tpu_custom_call.1']
    #allocation7 [shape = 'u8[32768]{0}', space=vmem, size = 0x8000, scoped, tag = 'input window, operand 3, single buffered']
    #allocation8 [shape = 'u8[8192]{0}', space=vmem, size = 0x2000, scoped, tag = 'output window, operand 0, single buffered']
    %10 = vsyncpa [#allocation3], 0
    %11 = vsyncpa [#allocation6], 0
    %12 = vsyncpa [#allocation4], 0
    // Predicated region
    $region2: #{tpu_custom_call.1} parent=1 // pred_check
      _
    $region3: #{tpu_custom_call.1} parent=1 // pred_check_branch
      %14 = sbr.rel (0) target = $region5
    $region4: #{tpu_custom_call.1} parent=1 // pred_region
      %16 = vsyncadd [#allocation3], 0
      %s17 = sshll.u32 %s0, 4
      %s18 = int_to_ptr.hbm [resolvable:$true] %s17
      %s19 = sshll.u32 [#allocation2], 4
      %s20 = int_to_ptr.vmem [resolvable:$true] %s19
      %25 = dma.hbm_to_vmem [thread:$0]  %s18, 128, %s20, [#allocation3], 64, 64, 4
    $region5: #{tpu_custom_call.1} parent=1 // pred_fallthru
      _
    // Predicated region
    $region6: #{tpu_custom_call.1} parent=1 // pred_check
      _
    $region7: #{tpu_custom_call.1} parent=1 // pred_check_branch
      %27 = sbr.rel (0) target = $region9
    $region8: #{tpu_custom_call.1} parent=1 // pred_region
      %29 = vsyncadd [#allocation6], 0
      %s30 = sshll.u32 %s1, 4
      %s31 = int_to_ptr.hbm [resolvable:$true] %s30
      %s32 = sshll.u32 [#allocation5], 4
      %s33 = int_to_ptr.vmem [resolvable:$true] %s32
      %38 = dma.hbm_to_vmem [thread:$0]  %s31, 1024, %s33, [#allocation6], 64, 64, 4
    $region9: #{tpu_custom_call.1} parent=1 // pred_fallthru
      _
    // Predicated region
    $region10: #{tpu_custom_call.1} parent=1 // pred_check
      _
    $region11: #{tpu_custom_call.1} parent=1 // pred_check_branch
      %40 = sbr.rel (0) target = $region13
    $region12: #{tpu_custom_call.1} parent=1 // pred_region
      _
    $region13: #{tpu_custom_call.1} parent=1 // pred_fallthru
      _
    // Predicated region
    $region14: #{tpu_custom_call.1} parent=1 // pred_check
      _
    $region15: #{tpu_custom_call.1} parent=1 // pred_check_branch
      %42 = sbr.rel (0) target = $region17
    $region16: #{tpu_custom_call.1} parent=1 // pred_region
      %44 = vsyncadd [#allocation6], 0
      %s45 = sshll.u32 %s3, 4
      %s46 = int_to_ptr.hbm [resolvable:$true] %s45
      %s47 = sshll.u32 [#allocation7], 4
      %s48 = int_to_ptr.vmem [resolvable:$true] %s47
      %53 = dma.hbm_to_vmem [thread:$0]  %s46, 1024, %s48, [#allocation6], 64, 64, 4
    $region17: #{tpu_custom_call.1} parent=1 // pred_fallthru
      _
    // Predicated region
    $region18: #{tpu_custom_call.1} parent=1 // pred_check
      _
    $region19: #{tpu_custom_call.1} parent=1 // pred_check_branch
      %55 = sbr.rel (0) target = $region21
    $region20: #{tpu_custom_call.1} parent=1 // pred_region
      _
    $region21: #{tpu_custom_call.1} parent=1 // pred_fallthru
      _
    // Predicated region
    $region22: #{tpu_custom_call.1} parent=1 // pred_check
      _
    $region23: #{tpu_custom_call.1} parent=1 // pred_check_branch
      %57 = sbr.rel (0) target = $region25
    $region24: #{tpu_custom_call.1} parent=1 // pred_region
      %59 = dma.done [#allocation3], 128
    $region25: #{tpu_custom_call.1} parent=1 // pred_fallthru
      _
    // Predicated region
    $region26: #{tpu_custom_call.1} parent=1 // pred_check
      _
    $region27: #{tpu_custom_call.1} parent=1 // pred_check_branch
      %61 = sbr.rel (0) target = $region29
    $region28: #{tpu_custom_call.1} parent=1 // pred_region
      %63 = dma.done [#allocation6], 1024
    $region29: #{tpu_custom_call.1} parent=1 // pred_fallthru
      _
    // Predicated region
    $region30: #{tpu_custom_call.1} parent=1 // pred_check
      _
    $region31: #{tpu_custom_call.1} parent=1 // pred_check_branch
      %65 = sbr.rel (0) target = $region33
    $region32: #{tpu_custom_call.1} parent=1 // pred_region
      %67 = dma.done [#allocation6], 1024
    $region33: #{tpu_custom_call.1} parent=1 // pred_fallthru
      _
    %v68 = vld [vmem:[#allocation2] sm:$0xf]
    %v69 = vld [vmem:[#allocation2 + $0x4] sm:$0xf]
    %v70 = vld [vmem:[#allocation5] sm:$0xf]
    %v71 = vld [vmem:[#allocation5 + $0x4] sm:$0xf]
    %v72 = vld [vmem:[#allocation5 + $0x8] sm:$0xf]
    %v73 = vld [vmem:[#allocation5 + $0xc] sm:$0xf]
    %v74 = vld [vmem:[#allocation5 + $0x10] sm:$0xf]
    %v75 = vld [vmem:[#allocation5 + $0x14] sm:$0xf]
    %v76 = vld [vmem:[#allocation5 + $0x18] sm:$0xf]
    %v77 = vld [vmem:[#allocation5 + $0x1c] sm:$0xf]
    %v78 = vld [vmem:[#allocation5 + $0x20] sm:$0xf]
    %v79 = vld [vmem:[#allocation5 + $0x24] sm:$0xf]
    %v80 = vld [vmem:[#allocation5 + $0x28] sm:$0xf]
    %v81 = vld [vmem:[#allocation5 + $0x2c] sm:$0xf]
    %v82 = vld [vmem:[#allocation5 + $0x30] sm:$0xf]
    %v83 = vld [vmem:[#allocation5 + $0x34] sm:$0xf]
    %v84 = vld [vmem:[#allocation5 + $0x38] sm:$0xf]
    %v85 = vld [vmem:[#allocation5 + $0x3c] sm:$0xf]
    %v86 = vld [vmem:[%s2] sm:$0x1]
    %v88 = vperm.slane %v86, 0
    %v92 = vunpack.c.l.b16 %v68
    %v93 = vunpack.c.l.b16 %v69
    %v94 = vpack.c.b16 %v93, %v92
    %v112 = vunpack.c.l.b16 %v70
    %v113 = vunpack.c.l.b16 %v71
    %v114 = vunpack.c.l.b16 %v72
    %v115 = vunpack.c.l.b16 %v73
    %v116 = vunpack.c.l.b16 %v74
    %v117 = vunpack.c.l.b16 %v75
    %v118 = vunpack.c.l.b16 %v76
    %v119 = vunpack.c.l.b16 %v77
    %v120 = vunpack.c.l.b16 %v78
    %v121 = vunpack.c.l.b16 %v79
    %v122 = vunpack.c.l.b16 %v80
    %v123 = vunpack.c.l.b16 %v81
    %v124 = vunpack.c.l.b16 %v82
    %v125 = vunpack.c.l.b16 %v83
    %v126 = vunpack.c.l.b16 %v84
    %v127 = vunpack.c.l.b16 %v85
    %v128 = vpack.c.b16 %v113, %v112
    %v129 = vpack.c.b16 %v115, %v114
    %v130 = vpack.c.b16 %v117, %v116
    %v131 = vpack.c.b16 %v119, %v118
    %v132 = vpack.c.b16 %v121, %v120
    %v133 = vpack.c.b16 %v123, %v122
    %v134 = vpack.c.b16 %v125, %v124
    %v135 = vpack.c.b16 %v127, %v126
    %144 = vmatpush.bf16.msra.mxu0 %v135
    %145 = vmatpush.bf16.msra.mxu0 %v134
    %146 = vmatpush.bf16.msra.mxu0 %v133
    %147 = vmatpush.bf16.msra.mxu0 %v132
    %148 = vmatpush.bf16.msra.mxu0 %v131
    %149 = vmatpush.bf16.msra.mxu0 %v130
    %150 = vmatpush.bf16.msra.mxu0 %v129
    %151 = vmatpush.bf16.msra.mxu0 %v128
    %152 = vmatmul.bf16.gmra.mxu0 %v94
    %v153 = vpop.f32.mrf.mxu0
    %v154 = vadd.f32 %v88, %v153
    %v155 = vpop.f32.mrf.mxu0
    %v156 = vadd.f32 %v88, %v155
    %157 = vdwg.mxu0
    %v158 = vmul.f32 %v154, 0.5
    %v159 = vmul.f32 %v156, 0.5
    %v160 = vmul.f32 %v154, 0.70710677
    %v161 = vmul.f32 %v156, 0.70710677
    %v162 = vmul.f32 %v160, %v160
    %v163 = vmin.f32 16.0, %v162
    %v164 = vmul.f32 %v163, 2.1237322e-06
    %v165 = vadd.f32 %v164, 0.00028619796
    %v166 = vmul.f32 %v163, %v165
    %v167 = vadd.f32 %v166, 0.0036580483
    %v168 = vmul.f32 %v163, %v167
    %v169 = vadd.f32 %v168, 0.05243302
    %v170 = vmul.f32 %v163, %v169
    %v171 = vadd.f32 %v170, 0.18741608
    %v172 = vmul.f32 %v163, %v171
    %v173 = vadd.f32 %v172, 1.1283791
    %v174 = vmul.f32 %v160, %v173
    %v175 = vmul.f32 %v163, 3.8918573e-05
    %v176 = vadd.f32 %v175, 0.001143296
    %v177 = vmul.f32 %v163, %v176
    %v178 = vadd.f32 %v177, 0.014752088
    %v179 = vmul.f32 %v163, %v178
    %v180 = vadd.f32 %v179, 0.112945676
    %v181 = vmul.f32 %v163, %v180
    %v182 = vadd.f32 %v181, 0.4994258
    %v183 = vmul.f32 %v163, %v182
    %v184 = vadd.f32 %v183, 1.0
    %v185 = vrcp.pop %v184
    %v186 = vmul.f32 %v184, %v185
    %v187 = vsub.f32 1.0, %v186
    %v188 = vmul.f32 %v185, %v187
    %v189 = vadd.f32 %v185, %v188
    %vm190 = vweird.f32 %v184
    %vm191 = vweird.f32 %v185
    %vm192 = vmor %vm190, %vm191
    %v193 = vsel %vm192, %v185, %v189
    %v194 = vand.u32 2147483647, %v184
    %vm195 = vcmp.eq.f32.partialorder %v194, 8.507059e+37
    %v196 = vand.u32 %v184, 2147483648
    %v197 = vor.u32 1.1754944e-38, %v196
    %v198 = vsel %vm195, %v197, %v193
    %v199 = vmul.f32 %v174, %v198
    %v200 = vmin.f32 %v199, 1.0
    %v201 = vmax.f32 %v200, -1.0
    %v202 = vmul.f32 %v161, %v161
    %v203 = vmin.f32 16.0, %v202
    %v204 = vmul.f32 %v203, 2.1237322e-06
    %v205 = vadd.f32 %v204, 0.00028619796
    %v206 = vmul.f32 %v203, %v205
    %v207 = vadd.f32 %v206, 0.0036580483
    %v208 = vmul.f32 %v203, %v207
    %v209 = vadd.f32 %v208, 0.05243302
    %v210 = vmul.f32 %v203, %v209
    %v211 = vadd.f32 %v210, 0.18741608
    %v212 = vmul.f32 %v203, %v211
    %v213 = vadd.f32 %v212, 1.1283791
    %v214 = vmul.f32 %v161, %v213
    %v215 = vmul.f32 %v203, 3.8918573e-05
    %v216 = vadd.f32 %v215, 0.001143296
    %v217 = vmul.f32 %v203, %v216
    %v218 = vadd.f32 %v217, 0.014752088
    %v219 = vmul.f32 %v203, %v218
    %v220 = vadd.f32 %v219, 0.112945676
    %v221 = vmul.f32 %v203, %v220
    %v222 = vadd.f32 %v221, 0.4994258
    %v223 = vmul.f32 %v203, %v222
    %v224 = vadd.f32 %v223, 1.0
    %v225 = vrcp.pop %v224
    %v226 = vmul.f32 %v224, %v225
    %v227 = vsub.f32 1.0, %v226
    %v228 = vmul.f32 %v225, %v227
    %v229 = vadd.f32 %v225, %v228
    %vm230 = vweird.f32 %v224
    %vm231 = vweird.f32 %v225
    %vm232 = vmor %vm230, %vm231
    %v233 = vsel %vm232, %v225, %v229
    %v234 = vand.u32 2147483647, %v224
    %vm235 = vcmp.eq.f32.partialorder %v234, 8.507059e+37
    %v236 = vand.u32 %v224, 2147483648
    %v237 = vor.u32 1.1754944e-38, %v236
    %v238 = vsel %vm235, %v237, %v233
    %v239 = vmul.f32 %v214, %v238
    %v240 = vmin.f32 %v239, 1.0
    %v241 = vmax.f32 %v240, -1.0
    %v242 = vadd.f32 %v201, 1.0
    %v243 = vadd.f32 %v241, 1.0
    %v244 = vmul.f32 %v158, %v242
    %v245 = vmul.f32 %v159, %v243
    %v246 = vpack.c.bf16 %v245, %v244
    %v247 = vld [vmem:[#allocation7] sm:$0xf]
    %v248 = vld [vmem:[#allocation7 + $0x4] sm:$0xf]
    %v249 = vld [vmem:[#allocation7 + $0x8] sm:$0xf]
    %v250 = vld [vmem:[#allocation7 + $0xc] sm:$0xf]
    %v251 = vld [vmem:[#allocation7 + $0x10] sm:$0xf]
    %v252 = vld [vmem:[#allocation7 + $0x14] sm:$0xf]
    %v253 = vld [vmem:[#allocation7 + $0x18] sm:$0xf]
    %v254 = vld [vmem:[#allocation7 + $0x1c] sm:$0xf]
    %v255 = vld [vmem:[#allocation7 + $0x20] sm:$0xf]
    %v256 = vld [vmem:[#allocation7 + $0x24] sm:$0xf]
    %v257 = vld [vmem:[#allocation7 + $0x28] sm:$0xf]
    %v258 = vld [vmem:[#allocation7 + $0x2c] sm:$0xf]
    %v259 = vld [vmem:[#allocation7 + $0x30] sm:$0xf]
    %v260 = vld [vmem:[#allocation7 + $0x34] sm:$0xf]
    %v261 = vld [vmem:[#allocation7 + $0x38] sm:$0xf]
    %v262 = vld [vmem:[#allocation7 + $0x3c] sm:$0xf]
    %v263 = vld [vmem:[%s4] sm:$0x1]
    %v265 = vperm.slane %v263, 0
    %v283 = vunpack.c.l.b16 %v247
    %v284 = vunpack.c.l.b16 %v248
    %v285 = vunpack.c.l.b16 %v249
    %v286 = vunpack.c.l.b16 %v250
    %v287 = vunpack.c.l.b16 %v251
    %v288 = vunpack.c.l.b16 %v252
    %v289 = vunpack.c.l.b16 %v253
    %v290 = vunpack.c.l.b16 %v254
    %v291 = vunpack.c.l.b16 %v255
    %v292 = vunpack.c.l.b16 %v256
    %v293 = vunpack.c.l.b16 %v257
    %v294 = vunpack.c.l.b16 %v258
    %v295 = vunpack.c.l.b16 %v259
    %v296 = vunpack.c.l.b16 %v260
    %v297 = vunpack.c.l.b16 %v261
    %v298 = vunpack.c.l.b16 %v262
    %v299 = vpack.c.b16 %v284, %v283
    %v300 = vpack.c.b16 %v286, %v285
    %v301 = vpack.c.b16 %v288, %v287
    %v302 = vpack.c.b16 %v290, %v289
    %v303 = vpack.c.b16 %v292, %v291
    %v304 = vpack.c.b16 %v294, %v293
    %v305 = vpack.c.b16 %v296, %v295
    %v306 = vpack.c.b16 %v298, %v297
    %315 = vmatpush.bf16.msra.mxu0 %v306
    %316 = vmatpush.bf16.msra.mxu0 %v305
    %317 = vmatpush.bf16.msra.mxu0 %v304
    %318 = vmatpush.bf16.msra.mxu0 %v303
    %319 = vmatpush.bf16.msra.mxu0 %v302
    %320 = vmatpush.bf16.msra.mxu0 %v301
    %321 = vmatpush.bf16.msra.mxu0 %v300
    %322 = vmatpush.bf16.msra.mxu0 %v299
    %323 = vmatmul.bf16.gmra.mxu0 %v246
    %v324 = vpop.f32.mrf.mxu0
    %v325 = vadd.f32 %v265, %v324
    %v326 = vpop.f32.mrf.mxu0
    %v327 = vadd.f32 %v265, %v326
    %328 = vdwg.mxu0
    %329 = vst [vmem:[#allocation8] sm:$0xff] %v325
    %330 = vst [vmem:[#allocation8 + $0x8] sm:$0xff] %v327
    // Predicated region
    $region34: #{tpu_custom_call.1} parent=1 // pred_check
      _
    $region35: #{tpu_custom_call.1} parent=1 // pred_check_branch
      %332 = sbr.rel (0) target = $region37
    $region36: #{tpu_custom_call.1} parent=1 // pred_region
      %334 = vsyncadd [#allocation4], 0
      %s335 = sshll.u32 [#allocation8], 4
      %s336 = int_to_ptr.vmem [resolvable:$true] %s335
      %s337 = sshll.u32 %s5, 4
      %s338 = int_to_ptr.hbm [resolvable:$true] %s337
      %343 = dma.vmem_to_hbm [thread:$0]  %s336, 256, %s338, [#allocation4], 128, 128, 8
    $region37: #{tpu_custom_call.1} parent=1 // pred_fallthru
      _
    // Predicated region
    $region38: #{tpu_custom_call.1} parent=1 // pred_check
      _
    $region39: #{tpu_custom_call.1} parent=1 // pred_check_branch
      %345 = sbr.rel (0) target = $region41
    $region40: #{tpu_custom_call.1} parent=1 // pred_region
      %347 = dma.done [#allocation4], 256
    $region41: #{tpu_custom_call.1} parent=1 // pred_fallthru
      _
    %348 = vsyncpa [#allocation3], 1
    %349 = vsyncpa [#allocation6], 1
    %350 = vsyncpa [#allocation4], 1

</llo_original>
